<compile_context>
chip_gen: v6e
topology: v6e:2x2x1
jax: 0.10.0
libtpu: 0.0.40
codegen_flags: <defaults>
</compile_context>

<pallas_src>
import jax
import jax.numpy as jnp
from jax.experimental import pallas as pl
from jax.experimental.pallas import tpu as pltpu

LANE = 128
SUBLANE = 8
MAX_TM = 4096          # batch rows per grid step (f32, multiple of 8 sublanes)


def _round_up(n, m):
    return ((n + m - 1) // m) * m


def mlp_kernel(x_ref, w1_ref, b1_ref, w2_ref, b2_ref, o_ref):
    # fc1: (TM, D) @ (D, H_pad) + (1, H_pad); f32 accumulation on the MXU.
    h = jnp.dot(x_ref[...], w1_ref[...], preferred_element_type=jnp.float32)
    h = jnp.maximum(h + b1_ref[...], 0.0)                 # bias + ReLU (VPU)
    # fc2: (TM, H_pad) @ (H_pad, C) + (1, C); only the real C columns exist,
    # so the store writes exactly what is needed (no padded lanes to HBM).
    out = jnp.dot(h, w2_ref[...], preferred_element_type=jnp.float32)
    o_ref[...] = (out + b2_ref[...]).astype(o_ref.dtype)


def pad_params(w1, b1, w2, b2):
    """One-time padding of the hidden dim to a full 128-lane width.

    w1: (D, H), b1: (H,), w2: (H, C), b2: (C,)  ->  padded VMEM-friendly forms.
    Zero padding is exact for this MLP (padded hidden units contribute 0).
    """
    D, H = w1.shape
    C = w2.shape[1]
    H_pad = _round_up(max(H, LANE), LANE)
    dt = w1.dtype
    w1_p = jnp.zeros((D, H_pad), dt).at[:, :H].set(w1)
    b1_p = jnp.zeros((1, H_pad), dt).at[0, :H].set(b1)
    w2_p = jnp.zeros((H_pad, C), dt).at[:H, :].set(w2)
    b2_p = b2.reshape(1, C).astype(dt)
    return w1_p, b1_p, w2_p, b2_p


def simple_nn_forward(x, w1_p, b1_p, w2_p, b2_p, *, tm=None):
    """x: (B, D); padded params from pad_params().  Returns (B, C)."""
    B, D = x.shape
    H_pad = w1_p.shape[1]
    C = w2_p.shape[1]

    # Big batch tile to amortize per-grid-step overhead; multiple of 8 sublanes.
    if tm is None:
        tm = min(_round_up(B, SUBLANE), MAX_TM)
    grid = (pl.cdiv(B, tm),)   # last tile may be partial; Pallas masks its writes

    flops = 2 * B * D * H_pad + 2 * B * H_pad * C
    bytes_accessed = 4 * (B * D + D * H_pad + H_pad + H_pad * C + C + B * C)

    return pl.pallas_call(
        mlp_kernel,
        out_shape=jax.ShapeDtypeStruct((B, C), x.dtype),
        grid_spec=pltpu.PrefetchScalarGridSpec(
            num_scalar_prefetch=0,
            grid=grid,
            in_specs=[
                # x streams over the batch grid axis (double-buffered).
                pl.BlockSpec((tm, D), lambda i: (i, 0)),
                # Weights / biases: constant index_map -> fetched once,
                # VMEM-resident across all grid steps.
                pl.BlockSpec((D, H_pad), lambda i: (0, 0)),
                pl.BlockSpec((1, H_pad), lambda i: (0, 0)),
                pl.BlockSpec((H_pad, C), lambda i: (0, 0)),
                pl.BlockSpec((1, C), lambda i: (0, 0)),
            ],
            out_specs=pl.BlockSpec((tm, C), lambda i: (i, 0)),
        ),
        compiler_params=pltpu.CompilerParams(
            dimension_semantics=("parallel",),   # shardable across v7x's 2 TCs
            vmem_limit_bytes=32 << 20,           # ample headroom, v7x-safe
        ),
        cost_estimate=pl.CostEstimate(
            flops=flops, transcendentals=0, bytes_accessed=bytes_accessed),
    )(x, w1_p, b1_p, w2_p, b2_p)


def init_params(key, input_size, hidden, num_classes):
    """PyTorch-style uniform(-1/sqrt(fan_in), 1/sqrt(fan_in)) init."""
    k1, k2, k3, k4 = jax.random.split(key, 4)
    bound1 = 1.0 / jnp.sqrt(input_size)
    bound2 = 1.0 / jnp.sqrt(hidden)
    w1 = jax.random.uniform(k1, (input_size, hidden), jnp.float32, -bound1, bound1)
    b1 = jax.random.uniform(k2, (hidden,), jnp.float32, -bound1, bound1)
    w2 = jax.random.uniform(k3, (hidden, num_classes), jnp.float32, -bound2, bound2)
    b2 = jax.random.uniform(k4, (num_classes,), jnp.float32, -bound2, bound2)
    return w1, b1, w2, b2


if __name__ == "__main__":
    input_size = 32
    hidden = 10          # fixed by the module: nn.Linear(input_size, 10)
    num_classes = 4
    batch = 8

    key = jax.random.PRNGKey(0)
    kx, kp = jax.random.split(key)
    x = jax.random.normal(kx, (batch, input_size), jnp.float32)
    w1, b1, w2, b2 = init_params(kp, input_size, hidden, num_classes)

    # Pad weights once, outside the per-call path.
    w1_p, b1_p, w2_p, b2_p = pad_params(w1, b1, w2, b2)

    out = jax.block_until_ready(simple_nn_forward(x, w1_p, b1_p, w2_p, b2_p))

    # Pure-JAX reference check (same math as the PyTorch module).
    ref = jnp.maximum(x @ w1 + b1, 0.0) @ w2 + b2
    assert out.shape == (batch, num_classes)
    assert jnp.allclose(out, ref, atol=1e-5, rtol=1e-5), "mismatch vs reference"

    # Multi-step grid + remainder tile path (no batch-padding copy of x):
    # B=1030 with tm=512 -> grid of 3 steps, last block only partially valid.
    big_b = 1030
    xb = jax.random.normal(jax.random.PRNGKey(1), (big_b, input_size), jnp.float32)
    out_b = jax.block_until_ready(
        simple_nn_forward(xb, w1_p, b1_p, w2_p, b2_p, tm=512))
    ref_b = jnp.maximum(xb @ w1 + b1, 0.0) @ w2 + b2
    assert out_b.shape == (big_b, num_classes)
    assert jnp.allclose(out_b, ref_b, atol=1e-4, rtol=1e-4), "mismatch (big batch)"

    print("KERNEL_OK")
</pallas_src>

<mosaic_0001>
module attributes {stable_mosaic.version = 11 : i64} {
  func.func @mlp_kernel(%arg0: i32, %arg1: memref<8x32xf32, #tpu.memory_space<vmem>>, %arg2: memref<32x128xf32, #tpu.memory_space<vmem>>, %arg3: memref<1x128xf32, #tpu.memory_space<vmem>>, %arg4: memref<128x4xf32, #tpu.memory_space<vmem>>, %arg5: memref<1x4xf32, #tpu.memory_space<vmem>>, %arg6: memref<8x4xf32, #tpu.memory_space<vmem>>) attributes {dimension_semantics = [#tpu.dimension_semantics<parallel>], iteration_bounds = array<i64: 1>, scalar_prefetch = 0 : i64, scratch_operands = 0 : i64, tpu.core_type = #tpu.core_type<tc>, window_params = [{transform_indices = @transform_0, window_bounds = array<i64: 8, 32>}, {pipeline_mode = #tpu.pipeline_mode<synchronous>, transform_indices = @transform_1, window_bounds = array<i64: 32, 128>}, {pipeline_mode = #tpu.pipeline_mode<synchronous>, transform_indices = @transform_2, window_bounds = array<i64: 1, 128>}, {pipeline_mode = #tpu.pipeline_mode<synchronous>, transform_indices = @transform_3, window_bounds = array<i64: 128, 4>}, {pipeline_mode = #tpu.pipeline_mode<synchronous>, transform_indices = @transform_4, window_bounds = array<i64: 1, 4>}, {transform_indices = @transform_5, window_bounds = array<i64: 8, 4>}]} {
    %c0 = arith.constant 0 : index
    %c0_0 = arith.constant 0 : index
    %0 = vector.load %arg1[%c0, %c0_0] : memref<8x32xf32, #tpu.memory_space<vmem>>, vector<8x32xf32>
    %c0_1 = arith.constant 0 : index
    %c0_2 = arith.constant 0 : index
    %1 = vector.load %arg2[%c0_1, %c0_2] : memref<32x128xf32, #tpu.memory_space<vmem>>, vector<32x128xf32>
    %cst = arith.constant dense<0.000000e+00> : vector<8x128xf32>
    %2 = tpu.matmul %0, %1, %cst {dimension_numbers = #tpu.dot_dimension_numbers<[1], [0], [0], [1], [0, 0, 1, 1], [], []>} : vector<8x32xf32>, vector<32x128xf32>, vector<8x128xf32> -> vector<8x128xf32>
    %c0_3 = arith.constant 0 : index
    %c0_4 = arith.constant 0 : index
    %3 = vector.load %arg3[%c0_3, %c0_4] : memref<1x128xf32, #tpu.memory_space<vmem>>, vector<1x128xf32>
    %4 = vector.broadcast %3 : vector<1x128xf32> to vector<8x128xf32>
    %5 = arith.addf %2, %4 : vector<8x128xf32>
    %cst_5 = arith.constant 0.000000e+00 : f32
    %6 = vector.broadcast %cst_5 : f32 to vector<8x128xf32>
    %7 = arith.maximumf %5, %6 : vector<8x128xf32>
    %c0_6 = arith.constant 0 : index
    %c0_7 = arith.constant 0 : index
    %8 = vector.load %arg4[%c0_6, %c0_7] : memref<128x4xf32, #tpu.memory_space<vmem>>, vector<128x4xf32>
    %cst_8 = arith.constant dense<0.000000e+00> : vector<8x4xf32>
    %9 = tpu.matmul %7, %8, %cst_8 {dimension_numbers = #tpu.dot_dimension_numbers<[1], [0], [0], [1], [0, 0, 1, 1], [], []>} : vector<8x128xf32>, vector<128x4xf32>, vector<8x4xf32> -> vector<8x4xf32>
    %c0_9 = arith.constant 0 : index
    %c0_10 = arith.constant 0 : index
    %10 = vector.load %arg5[%c0_9, %c0_10] : memref<1x4xf32, #tpu.memory_space<vmem>>, vector<1x4xf32>
    %11 = vector.broadcast %10 : vector<1x4xf32> to vector<8x4xf32>
    %12 = arith.addf %9, %11 : vector<8x4xf32>
    %c0_11 = arith.constant 0 : index
    %c0_12 = arith.constant 0 : index
    %13 = vector.load %arg6[%c0_11, %c0_12] : memref<8x4xf32, #tpu.memory_space<vmem>>, vector<8x4xf32>
    tpu.vector_store %arg6[%c0_11, %c0_12], %12 {strides = array<i32>} : memref<8x4xf32, #tpu.memory_space<vmem>>, vector<8x4xf32>,
    return
  }
  func.func @transform_0(%arg0: i32) -> (i32, i32) {
    %c0_i32 = arith.constant 0 : i32
    %c0_i32_0 = arith.constant 0 : i32
    return %arg0, %c0_i32 : i32, i32
  }
  func.func @transform_1(%arg0: i32) -> (i32, i32) {
    %c0_i32 = arith.constant 0 : i32
    %c0_i32_0 = arith.constant 0 : i32
    %c0_i32_1 = arith.constant 0 : i32
    return %c0_i32, %c0_i32_0 : i32, i32
  }
  func.func @transform_2(%arg0: i32) -> (i32, i32) {
    %c0_i32 = arith.constant 0 : i32
    %c0_i32_0 = arith.constant 0 : i32
    %c0_i32_1 = arith.constant 0 : i32
    return %c0_i32, %c0_i32_0 : i32, i32
  }
  func.func @transform_3(%arg0: i32) -> (i32, i32) {
    %c0_i32 = arith.constant 0 : i32
    %c0_i32_0 = arith.constant 0 : i32
    %c0_i32_1 = arith.constant 0 : i32
    return %c0_i32, %c0_i32_0 : i32, i32
  }
  func.func @transform_4(%arg0: i32) -> (i32, i32) {
    %c0_i32 = arith.constant 0 : i32
    %c0_i32_0 = arith.constant 0 : i32
    %c0_i32_1 = arith.constant 0 : i32
    return %c0_i32, %c0_i32_0 : i32, i32
  }
  func.func @transform_5(%arg0: i32) -> (i32, i32) {
    %c0_i32 = arith.constant 0 : i32
    %c0_i32_0 = arith.constant 0 : i32
    return %arg0, %c0_i32 : i32, i32
  }
}

</mosaic_0001>

<llo_original>
// kernel: tpu_custom_call.1
$region0: #{tpu_custom_call.1}
  #allocation0 [shape = 'u32[]', space=smem, size = 0x4, offset = 0x4, fixed_abs, tag = 'smem constant byte address 0x4 - core index']
  #allocation1 [shape = 'u32[144,128]{1,0:T(1,128)}', space=vmem, size = 0x12000, scoped, tag = 'internal scratch']
  %s0 = inlined_call_operand.vmem [shape: f32[8,32], index: 0, kind: input, shape index: {}]
  %s1 = inlined_call_operand.vmem [shape: f32[32,128], index: 1, kind: input, shape index: {}]
  %s2 = inlined_call_operand.vmem [shape: f32[1,128], index: 2, kind: input, shape index: {}]
  %s3 = inlined_call_operand.vmem [shape: f32[128,4], index: 3, kind: input, shape index: {}]
  %s4 = inlined_call_operand.vmem [shape: f32[1,4], index: 4, kind: input, shape index: {}]
  %s5 = inlined_call_operand.vmem [shape: f32[8,4], index: 5, kind: output, shape index: {}]
  %s6 = sld [smem:[#allocation0]]
  $region30: #{tpu_custom_call.1} parent=0
    _
  %s8 = ssub.s32 1, %s6
  %s9 = scalar_select 0, %s8, %s6
  // Predicated region
  $region2: #{tpu_custom_call.1} parent=0 // pred_check
    _
  $region3: #{tpu_custom_call.1} parent=0 // pred_check_branch
    %11 = sbr.rel (0) target = $region5
  $region4: #{tpu_custom_call.1} parent=0 // pred_region
    _
  $region5: #{tpu_custom_call.1} parent=0 // pred_fallthru
    _
  // Predicated region
  $region6: #{tpu_custom_call.1} parent=0 // pred_check
    _
  $region7: #{tpu_custom_call.1} parent=0 // pred_check_branch
    %13 = sbr.rel (0) target = $region9
  $region8: #{tpu_custom_call.1} parent=0 // pred_region
    _
  $region9: #{tpu_custom_call.1} parent=0 // pred_fallthru
    _
  // Predicated region
  $region10: #{tpu_custom_call.1} parent=0 // pred_check
    _
  $region11: #{tpu_custom_call.1} parent=0 // pred_check_branch
    %15 = sbr.rel (0) target = $region13
  $region12: #{tpu_custom_call.1} parent=0 // pred_region
    _
  $region13: #{tpu_custom_call.1} parent=0 // pred_fallthru
    _
  // Predicated region
  $region14: #{tpu_custom_call.1} parent=0 // pred_check
    _
  $region15: #{tpu_custom_call.1} parent=0 // pred_check_branch
    %17 = sbr.rel (0) target = $region17
  $region16: #{tpu_custom_call.1} parent=0 // pred_region
    _
  $region17: #{tpu_custom_call.1} parent=0 // pred_fallthru
    _
  // Predicated region
  $region18: #{tpu_custom_call.1} parent=0 // pred_check
    _
  $region19: #{tpu_custom_call.1} parent=0 // pred_check_branch
    %19 = sbr.rel (0) target = $region21
  $region20: #{tpu_custom_call.1} parent=0 // pred_region
    _
  $region21: #{tpu_custom_call.1} parent=0 // pred_fallthru
    _
  %v20 = vld [vmem:[%s0] sm:$0xff]
  %v21 = vld [vmem:[%s1] sm:$0xff]
  %v22 = vld [vmem:[%s1 + $0x8] sm:$0xff]
  %v23 = vld [vmem:[%s1 + $0x10] sm:$0xff]
  %v24 = vld [vmem:[%s1 + $0x18] sm:$0xff]
  %v25 = vld [vmem:[%s2] sm:$0x1]
  %v27 = vlaneseq
  %v28 = vshrl.u32 %v27, 7
  %v29 = vsub.s32 0, %v28
  %v30 = vrot.slane %v25, %v29
  %vm32 = vcmask 261120
  %v34 = vsel %vm32, %v20, 0
  %36 = vmatprep.subr.mxu0 0.0
  %37 = vmatpush1.msra.mxu0 0.0
  %38 = vmatprep.subr.mxu0 0.0
  %39 = vmatpush1.msra.mxu0 0.0
  %40 = vmatprep.subr.mxu0 0.0
  %41 = vmatpush1.msra.mxu0 0.0
  %42 = vmatprep.subr.mxu0 0.0
  %43 = vmatpush1.msra.mxu0 0.0
  %44 = vmatprep.subr.mxu0 0.0
  %45 = vmatpush1.msra.mxu0 0.0
  %46 = vmatprep.subr.mxu0 0.0
  %47 = vmatpush1.msra.mxu0 0.0
  %48 = vmatprep.subr.mxu0 0.0
  %49 = vmatpush1.msra.mxu0 0.0
  %50 = vmatprep.subr.mxu0 0.0
  %51 = vmatpush1.msra.mxu0 0.0
  %52 = vmatprep.subr.mxu0 0.0
  %53 = vmatpush1.msra.mxu0 0.0
  %54 = vmatprep.subr.mxu0 0.0
  %55 = vmatpush1.msra.mxu0 0.0
  %56 = vmatprep.subr.mxu0 0.0
  %57 = vmatpush1.msra.mxu0 0.0
  %58 = vmatprep.subr.mxu0 0.0
  %59 = vmatpush1.msra.mxu0 0.0
  %60 = vmatprep.subr.mxu0 0.0
  %61 = vmatpush1.msra.mxu0 %v24
  %62 = vmatprep.subr.mxu0 0.0
  %63 = vmatpush1.msra.mxu0 %v23
  %64 = vmatprep.subr.mxu0 0.0
  %65 = vmatpush1.msra.mxu0 %v22
  %66 = vmatprep.subr.mxu0 0.0
  %67 = vmatpush1.msra.mxu0 %v21
  %68 = vmatprep.subr.mxu0 0.0
  %69 = vmatpush2.msra.mxu0 0.0
  %70 = vmatprep.subr.mxu0 0.0
  %71 = vmatpush2.msra.mxu0 0.0
  %72 = vmatprep.subr.mxu0 0.0
  %73 = vmatpush2.msra.mxu0 0.0
  %74 = vmatprep.subr.mxu0 0.0
  %75 = vmatpush2.msra.mxu0 0.0
  %76 = vmatprep.subr.mxu0 0.0
  %77 = vmatpush2.msra.mxu0 0.0
  %78 = vmatprep.subr.mxu0 0.0
  %79 = vmatpush2.msra.mxu0 0.0
  %80 = vmatprep.subr.mxu0 0.0
  %81 = vmatpush2.msra.mxu0 0.0
  %82 = vmatprep.subr.mxu0 0.0
  %83 = vmatpush2.msra.mxu0 0.0
  %84 = vmatprep.subr.mxu0 0.0
  %85 = vmatpush2.msra.mxu0 0.0
  %86 = vmatprep.subr.mxu0 0.0
  %87 = vmatpush2.msra.mxu0 0.0
  %88 = vmatprep.subr.mxu0 0.0
  %89 = vmatpush2.msra.mxu0 0.0
  %90 = vmatprep.subr.mxu0 0.0
  %91 = vmatpush2.msra.mxu0 0.0
  %92 = vmatprep.subr.mxu0 0.0
  %93 = vmatpush2.msra.mxu0 0.0
  %94 = vmatprep.subr.mxu0 0.0
  %95 = vmatpush2.msra.mxu0 0.0
  %96 = vmatprep.subr.mxu0 0.0
  %97 = vmatpush2.msra.mxu0 0.0
  %98 = vmatprep.subr.mxu0 0.0
  %99 = vmatpush2.msra.mxu0 0.0
  %100 = vmatprep.mubr.f32.mxu0 0.0
  %101 = vmatmul.mubr.f32.gmra.mxu0 %v34
  %v102 = vpop.f32.mrf.mxu0
  %v103 = vadd.f32 %v30, %v102
  %v104 = vpop.f32.mrf.mxu0
  %105 = vdwg.mxu0
  %v106 = vmax.f32 %v103, 0.0
  %v107 = vld [vmem:[%s3] sm:$0xff]
  %v108 = vld [vmem:[%s3 + $0x8] sm:$0xff]
  %v109 = vld [vmem:[%s3 + $0x10] sm:$0xff]
  %v110 = vld [vmem:[%s3 + $0x18] sm:$0xff]
  %v111 = vld [vmem:[%s3 + $0x20] sm:$0xff]
  %v112 = vld [vmem:[%s3 + $0x28] sm:$0xff]
  %v113 = vld [vmem:[%s3 + $0x30] sm:$0xff]
  %v114 = vld [vmem:[%s3 + $0x38] sm:$0xff]
  %v115 = vld [vmem:[%s3 + $0x40] sm:$0xff]
  %v116 = vld [vmem:[%s3 + $0x48] sm:$0xff]
  %v117 = vld [vmem:[%s3 + $0x50] sm:$0xff]
  %v118 = vld [vmem:[%s3 + $0x58] sm:$0xff]
  %v119 = vld [vmem:[%s3 + $0x60] sm:$0xff]
  %v120 = vld [vmem:[%s3 + $0x68] sm:$0xff]
  %v121 = vld [vmem:[%s3 + $0x70] sm:$0xff]
  %v122 = vld [vmem:[%s3 + $0x78] sm:$0xff]
  %v123 = vld [vmem:[%s4] sm:$0x1]
  %v125 = vlaneseq
  %v126 = vshrl.u32 %v125, 7
  %v127 = vsub.s32 0, %v126
  %v128 = vrot.slane %v123, %v127
  %130 = vmatprep.subr.mxu0 0.0
  %131 = vmatpush1.msra.mxu0 %v122
  %132 = vmatprep.subr.mxu0 0.0
  %133 = vmatpush1.msra.mxu0 %v121
  %134 = vmatprep.subr.mxu0 0.0
  %135 = vmatpush1.msra.mxu0 %v120
  %136 = vmatprep.subr.mxu0 0.0
  %137 = vmatpush1.msra.mxu0 %v119
  %138 = vmatprep.subr.mxu0 0.0
  %139 = vmatpush1.msra.mxu0 %v118
  %140 = vmatprep.subr.mxu0 0.0
  %141 = vmatpush1.msra.mxu0 %v117
  %142 = vmatprep.subr.mxu0 0.0
  %143 = vmatpush1.msra.mxu0 %v116
  %144 = vmatprep.subr.mxu0 0.0
  %145 = vmatpush1.msra.mxu0 %v115
  %146 = vmatprep.subr.mxu0 0.0
  %147 = vmatpush1.msra.mxu0 %v114
  %148 = vmatprep.subr.mxu0 0.0
  %149 = vmatpush1.msra.mxu0 %v113
  %150 = vmatprep.subr.mxu0 0.0
  %151 = vmatpush1.msra.mxu0 %v112
  %152 = vmatprep.subr.mxu0 0.0
  %153 = vmatpush1.msra.mxu0 %v111
  %154 = vmatprep.subr.mxu0 0.0
  %155 = vmatpush1.msra.mxu0 %v110
  %156 = vmatprep.subr.mxu0 0.0
  %157 = vmatpush1.msra.mxu0 %v109
  %158 = vmatprep.subr.mxu0 0.0
  %159 = vmatpush1.msra.mxu0 %v108
  %160 = vmatprep.subr.mxu0 0.0
  %161 = vmatpush1.msra.mxu0 %v107
  %162 = vmatprep.subr.mxu0 0.0
  %163 = vmatpush2.msra.mxu0 0.0
  %164 = vmatprep.subr.mxu0 0.0
  %165 = vmatpush2.msra.mxu0 0.0
  %166 = vmatprep.subr.mxu0 0.0
  %167 = vmatpush2.msra.mxu0 0.0
  %168 = vmatprep.subr.mxu0 0.0
  %169 = vmatpush2.msra.mxu0 0.0
  %170 = vmatprep.subr.mxu0 0.0
  %171 = vmatpush2.msra.mxu0 0.0
  %172 = vmatprep.subr.mxu0 0.0
  %173 = vmatpush2.msra.mxu0 0.0
  %174 = vmatprep.subr.mxu0 0.0
  %175 = vmatpush2.msra.mxu0 0.0
  %176 = vmatprep.subr.mxu0 0.0
  %177 = vmatpush2.msra.mxu0 0.0
  %178 = vmatprep.subr.mxu0 0.0
  %179 = vmatpush2.msra.mxu0 0.0
  %180 = vmatprep.subr.mxu0 0.0
  %181 = vmatpush2.msra.mxu0 0.0
  %182 = vmatprep.subr.mxu0 0.0
  %183 = vmatpush2.msra.mxu0 0.0
  %184 = vmatprep.subr.mxu0 0.0
  %185 = vmatpush2.msra.mxu0 0.0
  %186 = vmatprep.subr.mxu0 0.0
  %187 = vmatpush2.msra.mxu0 0.0
  %188 = vmatprep.subr.mxu0 0.0
  %189 = vmatpush2.msra.mxu0 0.0
  %190 = vmatprep.subr.mxu0 0.0
  %191 = vmatpush2.msra.mxu0 0.0
  %192 = vmatprep.subr.mxu0 0.0
  %193 = vmatpush2.msra.mxu0 0.0
  %194 = vmatprep.mubr.f32.mxu0 0.0
  %195 = vmatmul.mubr.f32.gmra.mxu0 %v106
  %v196 = vpop.f32.mrf.mxu0
  %v197 = vadd.f32 %v128, %v196
  %v198 = vpop.f32.mrf.mxu0
  %199 = vdwg.mxu0
  %vm200 = vcmask 31744
  %201 = vst.msk [vmem:[%s5] sm:$0xff] %vm200, %v197
  // Predicated region
  $region22: #{tpu_custom_call.1} parent=0 // pred_check
    _
  $region23: #{tpu_custom_call.1} parent=0 // pred_check_branch
    %203 = sbr.rel (0) target = $region25
  $region24: #{tpu_custom_call.1} parent=0 // pred_region
    _
  $region25: #{tpu_custom_call.1} parent=0 // pred_fallthru
    _
  // Predicated region
  $region26: #{tpu_custom_call.1} parent=0 // pred_check
    _
  $region27: #{tpu_custom_call.1} parent=0 // pred_check_branch
    %205 = sbr.rel (0) target = $region29
  $region28: #{tpu_custom_call.1} parent=0 // pred_region
    _
  $region29: #{tpu_custom_call.1} parent=0 // pred_fallthru
    _

</llo_original>
